<compile_context>
chip_gen: v7x
topology: tpu7x:2x2x1
jax: 0.10.0
libtpu: 0.0.40
codegen_flags: <defaults>
</compile_context>

<pallas_src>
import functools

import jax
import jax.numpy as jnp
from jax import lax
from jax.experimental import pallas as pl
from jax.experimental.pallas import tpu as pltpu


def _predictor_kernel(x_ref, w1_ref, b1_ref, w2_ref, b2_ref,
                      out_ref, rowsq_ref, *, batch):
    """Fused encoder forward + per-row squared-error partials.

    x_ref    : [TB, D]  f32   flattened input tile (streamed)
    w1_ref   : [D, H]   bf16  first linear weight (torch weight.T, resident)
    b1_ref   : [1, H]   f32   (resident)
    w2_ref   : [H, D]   bf16  second linear weight (torch weight.T, resident)
    b2_ref   : [1, D]   f32   (resident)
    out_ref  : [TB, D]  bf16  reconstruction tile ("out")
    rowsq_ref: [TB, 1]  f32   per-row sum of squared error (lane-reduced,
                              tail rows past `batch` masked to zero)
    """
    x = x_ref[...]                                        # f32

    # Linear 1 + ReLU  (bf16 MXU operands, f32 accumulation, f32 epilogue).
    h = jnp.dot(x.astype(jnp.bfloat16), w1_ref[...],
                preferred_element_type=jnp.float32)
    h = jnp.maximum(h + b1_ref[...], 0.0)

    # Linear 2.
    y = jnp.dot(h.astype(jnp.bfloat16), w2_ref[...],
                preferred_element_type=jnp.float32)
    y = y + b2_ref[...]

    # loss_module (MSE) partials: computed from the f32 `y` BEFORE the bf16
    # downcast so the loss is not double-rounded.  Lane-axis reduce per row
    # (XLU slot); the row reduce and divide-by-(B*D) finish in the wrapper.
    diff = y - x
    rowsq = jnp.sum(diff * diff, axis=-1, keepdims=True)  # [TB, 1]

    # Mask rows past the true batch (partial last tile) so the wrapper can sum
    # the partials without slicing.  Essentially free (VPU compare + select).
    tb = x_ref.shape[0]
    row = pl.program_id(0) * tb + lax.broadcasted_iota(jnp.int32, (tb, 1), 0)
    rowsq_ref[...] = jnp.where(row < batch, rowsq, 0.0)

    # bf16 output store (halves the out-write HBM traffic).
    out_ref[...] = y.astype(out_ref.dtype)


def _round_up(x, m):
    return ((x + m - 1) // m) * m


def _choose_tb(batch, tb_max=512, target_steps=4):
    """Batch tile: whole batch if tiny, else aim for >= target_steps grid
    steps (v7x megacore + pipelining), rounded to bf16 sublane packing (16),
    capped at tb_max so double-buffers fit v5e's 16 MiB default scoped VMEM."""
    if batch <= 16:
        return int(batch)                 # block dims == array dims: always legal
    tb = _round_up(max(1, -(-batch // target_steps)), 16)
    return int(min(tb_max, max(16, tb)))


def predictor_forward(x_nchw, w1_bf16, b1, w2_bf16, b2, *, tb_max=512):
    """Mirrors Predictor.forward: returns ({"out": out}, {"mse": loss}).

    w1_bf16 / w2_bf16 are the [in, out] (torch weight.T) matrices, expected
    to already be stored in bf16; b1 / b2 are [1, out] f32 biases.
    """
    B = x_nchw.shape[0]
    D, HID = w1_bf16.shape

    x_flat = x_nchw.reshape(B, D).astype(jnp.float32)      # == torch .reshape(B,-1)
    w1_bf = w1_bf16.astype(jnp.bfloat16)                   # no-op if already bf16
    w2_bf = w2_bf16.astype(jnp.bfloat16)
    b1_f = b1.reshape(1, HID).astype(jnp.float32)
    b2_f = b2.reshape(1, D).astype(jnp.float32)

    TB = _choose_tb(B, tb_max)
    grid = (pl.cdiv(B, TB),)

    cost = pl.CostEstimate(
        flops=4 * B * D * HID,                              # two matmuls
        transcendentals=0,
        bytes_accessed=(B * D * 4                           # x read   (f32)
                        + B * D * 2                         # out write (bf16)
                        + B * 4                             # row partials
                        + 2 * D * HID * 2                   # bf16 weights
                        + (HID + D) * 4),                   # f32 biases
    )

    out, row_sq = pl.pallas_call(
        functools.partial(_predictor_kernel, batch=B),
        out_shape=(
            jax.ShapeDtypeStruct((B, D), jnp.bfloat16),
            jax.ShapeDtypeStruct((B, 1), jnp.float32),
        ),
        grid=grid,
        in_specs=[
            pl.BlockSpec((TB, D), lambda i: (i, 0)),        # x: streamed
            pl.BlockSpec((D, HID), lambda i: (0, 0)),       # w1: resident
            pl.BlockSpec((1, HID), lambda i: (0, 0)),       # b1: resident
            pl.BlockSpec((HID, D), lambda i: (0, 0)),       # w2: resident
            pl.BlockSpec((1, D), lambda i: (0, 0)),         # b2: resident
        ],
        out_specs=(
            pl.BlockSpec((TB, D), lambda i: (i, 0)),        # out: streamed
            pl.BlockSpec((TB, 1), lambda i: (i, 0)),        # per-row sq partials
        ),
        compiler_params=pltpu.CompilerParams(
            dimension_semantics=("parallel",)),             # 2x on v7x megacore
        cost_estimate=cost,
    )(x_flat, w1_bf, b1_f, w2_bf, b2_f)

    out_nchw = out.reshape(x_nchw.shape)                    # bf16, back to NCHW
    loss = jnp.sum(row_sq) / jnp.float32(B * D)             # finish the mean
    return {"out": out_nchw}, {"mse": loss}


if __name__ == "__main__":
    # Deterministic small shapes: batch=2, channels=4, spatial=16x16, hidden=32.
    B, C, Himg, Wimg = 2, 4, 16, 16
    D = C * Himg * Wimg                                     # 1024
    HID = 32

    key = jax.random.PRNGKey(0)
    kx, kw1, kb1, kw2, kb2 = jax.random.split(key, 5)

    x = jax.random.normal(kx, (B, C, Himg, Wimg), dtype=jnp.float32)
    # "Linear" parameters stored as [in, out] = torch weight.T.  Weights are
    # kept in bf16 (cast hoisted out of the forward); biases stay f32.
    w1 = (jax.random.normal(kw1, (D, HID), dtype=jnp.float32) * 0.02
          ).astype(jnp.bfloat16)
    b1 = jax.random.normal(kb1, (1, HID), dtype=jnp.float32) * 0.02
    w2 = (jax.random.normal(kw2, (HID, D), dtype=jnp.float32) * 0.02
          ).astype(jnp.bfloat16)
    b2 = jax.random.normal(kb2, (1, D), dtype=jnp.float32) * 0.02

    fwd = jax.jit(predictor_forward)
    out_dict, loss_dict = fwd(x, w1, b1, w2, b2)
    jax.block_until_ready((out_dict["out"], loss_dict["mse"]))

    # Pure-JAX reference using the same dtype chain (bf16 MXU operands,
    # f32 accumulation / epilogue, loss from f32 pre-downcast activations).
    xf = x.reshape(B, D)
    h_ref = jnp.maximum(
        jnp.dot(xf.astype(jnp.bfloat16), w1,
                preferred_element_type=jnp.float32) + b1, 0.0)
    ref_out = jnp.dot(h_ref.astype(jnp.bfloat16), w2,
                      preferred_element_type=jnp.float32) + b2
    ref_loss = jnp.mean((ref_out - xf) ** 2)

    assert out_dict["out"].dtype == jnp.bfloat16
    assert jnp.allclose(out_dict["out"].reshape(B, D).astype(jnp.float32),
                        ref_out, atol=2e-2, rtol=2e-2)
    assert jnp.allclose(loss_dict["mse"], ref_loss, atol=1e-3, rtol=1e-3)

    print("KERNEL_OK")
</pallas_src>

<mosaic_0001>
module attributes {stable_mosaic.version = 11 : i64} {
  func.func @_predictor_kernel(%arg0: i32, %arg1: memref<2x1024xf32, #tpu.memory_space<vmem>>, %arg2: memref<1024x32xbf16, #tpu.memory_space<vmem>>, %arg3: memref<1x32xf32, #tpu.memory_space<vmem>>, %arg4: memref<32x1024xbf16, #tpu.memory_space<vmem>>, %arg5: memref<1x1024xf32, #tpu.memory_space<vmem>>, %arg6: memref<2x1024xbf16, #tpu.memory_space<vmem>>, %arg7: memref<2x1xf32, #tpu.memory_space<vmem>>) attributes {dimension_semantics = [#tpu.dimension_semantics<parallel>], iteration_bounds = array<i64: 1>, scalar_prefetch = 0 : i64, scratch_operands = 0 : i64, tpu.core_type = #tpu.core_type<tc>, window_params = [{transform_indices = @transform_0, window_bounds = array<i64: 2, 1024>}, {pipeline_mode = #tpu.pipeline_mode<synchronous>, transform_indices = @transform_1, window_bounds = array<i64: 1024, 32>}, {pipeline_mode = #tpu.pipeline_mode<synchronous>, transform_indices = @transform_2, window_bounds = array<i64: 1, 32>}, {pipeline_mode = #tpu.pipeline_mode<synchronous>, transform_indices = @transform_3, window_bounds = array<i64: 32, 1024>}, {pipeline_mode = #tpu.pipeline_mode<synchronous>, transform_indices = @transform_4, window_bounds = array<i64: 1, 1024>}, {transform_indices = @transform_5, window_bounds = array<i64: 2, 1024>}, {transform_indices = @transform_6, window_bounds = array<i64: 2, 1>}]} {
    %c0 = arith.constant 0 : index
    %c0_0 = arith.constant 0 : index
    %0 = vector.load %arg1[%c0, %c0_0] : memref<2x1024xf32, #tpu.memory_space<vmem>>, vector<2x1024xf32>
    %1 = arith.truncf %0 : vector<2x1024xf32> to vector<2x1024xbf16>
    %c0_1 = arith.constant 0 : index
    %c0_2 = arith.constant 0 : index
    %2 = vector.load %arg2[%c0_1, %c0_2] : memref<1024x32xbf16, #tpu.memory_space<vmem>>, vector<1024x32xbf16>
    %cst = arith.constant dense<0.000000e+00> : vector<2x32xf32>
    %3 = tpu.matmul %1, %2, %cst {dimension_numbers = #tpu.dot_dimension_numbers<[1], [0], [0], [1], [0, 0, 1, 1], [], []>} : vector<2x1024xbf16>, vector<1024x32xbf16>, vector<2x32xf32> -> vector<2x32xf32>
    %c0_3 = arith.constant 0 : index
    %c0_4 = arith.constant 0 : index
    %4 = vector.load %arg3[%c0_3, %c0_4] : memref<1x32xf32, #tpu.memory_space<vmem>>, vector<1x32xf32>
    %5 = vector.broadcast %4 : vector<1x32xf32> to vector<2x32xf32>
    %6 = arith.addf %3, %5 : vector<2x32xf32>
    %cst_5 = arith.constant 0.000000e+00 : f32
    %7 = vector.broadcast %cst_5 : f32 to vector<2x32xf32>
    %8 = arith.maximumf %6, %7 : vector<2x32xf32>
    %9 = arith.truncf %8 : vector<2x32xf32> to vector<2x32xbf16>
    %c0_6 = arith.constant 0 : index
    %c0_7 = arith.constant 0 : index
    %10 = vector.load %arg4[%c0_6, %c0_7] : memref<32x1024xbf16, #tpu.memory_space<vmem>>, vector<32x1024xbf16>
    %cst_8 = arith.constant dense<0.000000e+00> : vector<2x1024xf32>
    %11 = tpu.matmul %9, %10, %cst_8 {dimension_numbers = #tpu.dot_dimension_numbers<[1], [0], [0], [1], [0, 0, 1, 1], [], []>} : vector<2x32xbf16>, vector<32x1024xbf16>, vector<2x1024xf32> -> vector<2x1024xf32>
    %c0_9 = arith.constant 0 : index
    %c0_10 = arith.constant 0 : index
    %12 = vector.load %arg5[%c0_9, %c0_10] : memref<1x1024xf32, #tpu.memory_space<vmem>>, vector<1x1024xf32>
    %13 = vector.broadcast %12 : vector<1x1024xf32> to vector<2x1024xf32>
    %14 = arith.addf %11, %13 : vector<2x1024xf32>
    %15 = arith.subf %14, %0 : vector<2x1024xf32>
    %16 = arith.mulf %15, %15 : vector<2x1024xf32>
    %cst_11 = arith.constant dense<0.000000e+00> : vector<2xf32>
    %17 = vector.multi_reduction <add>, %16, %cst_11 [1] : vector<2x1024xf32> to vector<2xf32>
    %18 = vector.shape_cast %17 : vector<2xf32> to vector<2x1xf32>
    %c2_i32 = arith.constant 2 : i32
    %19 = arith.muli %arg0, %c2_i32 : i32
    %20 = tpu.iota {dimensions = array<i32: 0>} : vector<2x1xi32>
    %21 = vector.broadcast %19 : i32 to vector<2x1xi32>
    %22 = arith.addi %21, %20 : vector<2x1xi32>
    %c2_i32_12 = arith.constant 2 : i32
    %23 = vector.broadcast %c2_i32_12 : i32 to vector<2x1xi32>
    %24 = arith.cmpi slt, %22, %23 : vector<2x1xi32>
    %cst_13 = arith.constant 0.000000e+00 : f32
    %25 = vector.broadcast %cst_13 : f32 to vector<2x1xf32>
    %26 = arith.select %24, %18, %25 : vector<2x1xi1>, vector<2x1xf32>
    %c0_14 = arith.constant 0 : index
    %c0_15 = arith.constant 0 : index
    %27 = vector.load %arg7[%c0_14, %c0_15] : memref<2x1xf32, #tpu.memory_space<vmem>>, vector<2x1xf32>
    tpu.vector_store %arg7[%c0_14, %c0_15], %26 {strides = array<i32>} : memref<2x1xf32, #tpu.memory_space<vmem>>, vector<2x1xf32>,
    %28 = arith.truncf %14 : vector<2x1024xf32> to vector<2x1024xbf16>
    %c0_16 = arith.constant 0 : index
    %c0_17 = arith.constant 0 : index
    %29 = vector.load %arg6[%c0_16, %c0_17] : memref<2x1024xbf16, #tpu.memory_space<vmem>>, vector<2x1024xbf16>
    tpu.vector_store %arg6[%c0_16, %c0_17], %28 {strides = array<i32>} : memref<2x1024xbf16, #tpu.memory_space<vmem>>, vector<2x1024xbf16>,
    return
  }
  func.func @transform_0(%arg0: i32) -> (i32, i32) {
    %c0_i32 = arith.constant 0 : i32
    %c0_i32_0 = arith.constant 0 : i32
    return %arg0, %c0_i32 : i32, i32
  }
  func.func @transform_1(%arg0: i32) -> (i32, i32) {
    %c0_i32 = arith.constant 0 : i32
    %c0_i32_0 = arith.constant 0 : i32
    %c0_i32_1 = arith.constant 0 : i32
    return %c0_i32, %c0_i32_0 : i32, i32
  }
  func.func @transform_2(%arg0: i32) -> (i32, i32) {
    %c0_i32 = arith.constant 0 : i32
    %c0_i32_0 = arith.constant 0 : i32
    %c0_i32_1 = arith.constant 0 : i32
    return %c0_i32, %c0_i32_0 : i32, i32
  }
  func.func @transform_3(%arg0: i32) -> (i32, i32) {
    %c0_i32 = arith.constant 0 : i32
    %c0_i32_0 = arith.constant 0 : i32
    %c0_i32_1 = arith.constant 0 : i32
    return %c0_i32, %c0_i32_0 : i32, i32
  }
  func.func @transform_4(%arg0: i32) -> (i32, i32) {
    %c0_i32 = arith.constant 0 : i32
    %c0_i32_0 = arith.constant 0 : i32
    %c0_i32_1 = arith.constant 0 : i32
    return %c0_i32, %c0_i32_0 : i32, i32
  }
  func.func @transform_5(%arg0: i32) -> (i32, i32) {
    %c0_i32 = arith.constant 0 : i32
    %c0_i32_0 = arith.constant 0 : i32
    return %arg0, %c0_i32 : i32, i32
  }
  func.func @transform_6(%arg0: i32) -> (i32, i32) {
    %c0_i32 = arith.constant 0 : i32
    %c0_i32_0 = arith.constant 0 : i32
    return %arg0, %c0_i32 : i32, i32
  }
}

</mosaic_0001>

<llo_original>
// kernel: predictor_forward.1
$region0: #{predictor_forward.1}
  #allocation0 [shape = 'u32[]', space=smem, size = 0x4, offset = 0x4, fixed_abs, tag = 'smem constant byte address 0x4 - core index']
  #allocation1 [shape = 'u32[144,128]{1,0:T(1,128)}', space=vmem, size = 0x12000, scoped, tag = 'internal scratch']
  %s0 = inlined_call_operand.vmem [shape: f32[2,1024], index: 0, kind: input, shape index: {}]
  %s1 = inlined_call_operand.vmem [shape: bf16[1024,32], index: 1, kind: input, shape index: {}]
  %s2 = inlined_call_operand.vmem [shape: f32[1,32], index: 2, kind: input, shape index: {}]
  %s3 = inlined_call_operand.vmem [shape: bf16[32,1024], index: 3, kind: input, shape index: {}]
  %s4 = inlined_call_operand.vmem [shape: f32[1,1024], index: 4, kind: input, shape index: {}]
  %s5 = inlined_call_operand.vmem [shape: bf16[2,1024], index: 5, kind: output, shape index: {0}]
  %s6 = inlined_call_operand.vmem [shape: f32[2,1], index: 6, kind: output, shape index: {1}]
  %7 = xla_tuple %s5, %s6
  %s8 = sld [smem:[#allocation0]]
  $region38: #{predictor_forward.1} parent=0
    _
  %s10 = ssub.s32 1, %s8
  %s11 = scalar_select 0, %s10, %s8
  // Predicated region
  $region2: #{predictor_forward.1} parent=0 // pred_check
    _
  $region3: #{predictor_forward.1} parent=0 // pred_check_branch
    %13 = sbr.rel (0) target = $region5
  $region4: #{predictor_forward.1} parent=0 // pred_region
    _
  $region5: #{predictor_forward.1} parent=0 // pred_fallthru
    _
  // Predicated region
  $region6: #{predictor_forward.1} parent=0 // pred_check
    _
  $region7: #{predictor_forward.1} parent=0 // pred_check_branch
    %15 = sbr.rel (0) target = $region9
  $region8: #{predictor_forward.1} parent=0 // pred_region
    _
  $region9: #{predictor_forward.1} parent=0 // pred_fallthru
    _
  // Predicated region
  $region10: #{predictor_forward.1} parent=0 // pred_check
    _
  $region11: #{predictor_forward.1} parent=0 // pred_check_branch
    %17 = sbr.rel (0) target = $region13
  $region12: #{predictor_forward.1} parent=0 // pred_region
    _
  $region13: #{predictor_forward.1} parent=0 // pred_fallthru
    _
  // Predicated region
  $region14: #{predictor_forward.1} parent=0 // pred_check
    _
  $region15: #{predictor_forward.1} parent=0 // pred_check_branch
    %19 = sbr.rel (0) target = $region17
  $region16: #{predictor_forward.1} parent=0 // pred_region
    _
  $region17: #{predictor_forward.1} parent=0 // pred_fallthru
    _
  // Predicated region
  $region18: #{predictor_forward.1} parent=0 // pred_check
    _
  $region19: #{predictor_forward.1} parent=0 // pred_check_branch
    %21 = sbr.rel (0) target = $region21
  $region20: #{predictor_forward.1} parent=0 // pred_region
    _
  $region21: #{predictor_forward.1} parent=0 // pred_fallthru
    _
  %v23 = vld [vmem:[%s0] sm:$0xff]
  %v24 = vld [vmem:[%s0 + $0x8] sm:$0xff]
  %v27 = vcombine.high %v23, %v23
  %v29 = vunpack.c.l.s4 1983009808
  %v30 = vunpack.c.0.s8 %v29
  %v31 = vlaneseq
  %v32 = vshrl.u32 %v31, 7
  %v33 = vsub.s32 %v30, %v32
  %v34 = vrot.slane %v23, %v33
  %v36 = vunpack.c.l.s4 1983009808
  %v37 = vunpack.c.0.s8 %v36
  %v38 = vlaneseq
  %v39 = vshrl.u32 %v38, 7
  %v40 = vsub.s32 %v37, %v39
  %v41 = vrot.slane %v27, %v40
  %v42 = vcombine.high %v34, %v34
  %v43 = vcombine.high %v41, %v41
  %v44 = vcombine.high %v24, %v24
  %v46 = vunpack.c.l.s4 1983009808
  %v47 = vunpack.c.0.s8 %v46
  %v48 = vlaneseq
  %v49 = vshrl.u32 %v48, 7
  %v50 = vsub.s32 %v47, %v49
  %v51 = vrot.slane %v24, %v50
  %v53 = vunpack.c.l.s4 1983009808
  %v54 = vunpack.c.0.s8 %v53
  %v55 = vlaneseq
  %v56 = vshrl.u32 %v55, 7
  %v57 = vsub.s32 %v54, %v56
  %v58 = vrot.slane %v44, %v57
  %v59 = vcombine.high %v51, %v51
  %v60 = vcombine.high %v58, %v58
  %v69 = vpack.c.bf16 %v34, %v34
  %v70 = vpack.c.bf16 %v42, %v42
  %v71 = vpack.c.bf16 %v41, %v41
  %v72 = vpack.c.bf16 %v43, %v43
  %v73 = vpack.c.bf16 %v51, %v51
  %v74 = vpack.c.bf16 %v59, %v59
  %v75 = vpack.c.bf16 %v58, %v58
  %v76 = vpack.c.bf16 %v60, %v60
  %v77 = vld [vmem:[%s1] sm:$0xf]
  %v78 = vld [vmem:[%s1 + $0x4] sm:$0xf]
  %v79 = vld [vmem:[%s1 + $0x8] sm:$0xf]
  %v80 = vld [vmem:[%s1 + $0xc] sm:$0xf]
  %v81 = vld [vmem:[%s1 + $0x10] sm:$0xf]
  %v82 = vld [vmem:[%s1 + $0x14] sm:$0xf]
  %v83 = vld [vmem:[%s1 + $0x18] sm:$0xf]
  %v84 = vld [vmem:[%s1 + $0x1c] sm:$0xf]
  %v85 = vld [vmem:[%s1 + $0x20] sm:$0xf]
  %v86 = vld [vmem:[%s1 + $0x24] sm:$0xf]
  %v87 = vld [vmem:[%s1 + $0x28] sm:$0xf]
  %v88 = vld [vmem:[%s1 + $0x2c] sm:$0xf]
  %v89 = vld [vmem:[%s1 + $0x30] sm:$0xf]
  %v90 = vld [vmem:[%s1 + $0x34] sm:$0xf]
  %v91 = vld [vmem:[%s1 + $0x38] sm:$0xf]
  %v92 = vld [vmem:[%s1 + $0x3c] sm:$0xf]
  %v93 = vld [vmem:[%s1 + $0x40] sm:$0xf]
  %v94 = vld [vmem:[%s1 + $0x44] sm:$0xf]
  %v95 = vld [vmem:[%s1 + $0x48] sm:$0xf]
  %v96 = vld [vmem:[%s1 + $0x4c] sm:$0xf]
  %v97 = vld [vmem:[%s1 + $0x50] sm:$0xf]
  %v98 = vld [vmem:[%s1 + $0x54] sm:$0xf]
  %v99 = vld [vmem:[%s1 + $0x58] sm:$0xf]
  %v100 = vld [vmem:[%s1 + $0x5c] sm:$0xf]
  %v101 = vld [vmem:[%s1 + $0x60] sm:$0xf]
  %v102 = vld [vmem:[%s1 + $0x64] sm:$0xf]
  %v103 = vld [vmem:[%s1 + $0x68] sm:$0xf]
  %v104 = vld [vmem:[%s1 + $0x6c] sm:$0xf]
  %v105 = vld [vmem:[%s1 + $0x70] sm:$0xf]
  %v106 = vld [vmem:[%s1 + $0x74] sm:$0xf]
  %v107 = vld [vmem:[%s1 + $0x78] sm:$0xf]
  %v108 = vld [vmem:[%s1 + $0x7c] sm:$0xf]
  %v109 = vld [vmem:[%s1 + $0x80] sm:$0xf]
  %v110 = vld [vmem:[%s1 + $0x84] sm:$0xf]
  %v111 = vld [vmem:[%s1 + $0x88] sm:$0xf]
  %v112 = vld [vmem:[%s1 + $0x8c] sm:$0xf]
  %v113 = vld [vmem:[%s1 + $0x90] sm:$0xf]
  %v114 = vld [vmem:[%s1 + $0x94] sm:$0xf]
  %v115 = vld [vmem:[%s1 + $0x98] sm:$0xf]
  %v116 = vld [vmem:[%s1 + $0x9c] sm:$0xf]
  %v117 = vld [vmem:[%s1 + $0xa0] sm:$0xf]
  %v118 = vld [vmem:[%s1 + $0xa4] sm:$0xf]
  %v119 = vld [vmem:[%s1 + $0xa8] sm:$0xf]
  %v120 = vld [vmem:[%s1 + $0xac] sm:$0xf]
  %v121 = vld [vmem:[%s1 + $0xb0] sm:$0xf]
  %v122 = vld [vmem:[%s1 + $0xb4] sm:$0xf]
  %v123 = vld [vmem:[%s1 + $0xb8] sm:$0xf]
  %v124 = vld [vmem:[%s1 + $0xbc] sm:$0xf]
  %v125 = vld [vmem:[%s1 + $0xc0] sm:$0xf]
  %v126 = vld [vmem:[%s1 + $0xc4] sm:$0xf]
  %v127 = vld [vmem:[%s1 + $0xc8] sm:$0xf]
  %v128 = vld [vmem:[%s1 + $0xcc] sm:$0xf]
  %v129 = vld [vmem:[%s1 + $0xd0] sm:$0xf]
  %v130 = vld [vmem:[%s1 + $0xd4] sm:$0xf]
  %v131 = vld [vmem:[%s1 + $0xd8] sm:$0xf]
  %v132 = vld [vmem:[%s1 + $0xdc] sm:$0xf]
  %v133 = vld [vmem:[%s1 + $0xe0] sm:$0xf]
  %v134 = vld [vmem:[%s1 + $0xe4] sm:$0xf]
  %v135 = vld [vmem:[%s1 + $0xe8] sm:$0xf]
  %v136 = vld [vmem:[%s1 + $0xec] sm:$0xf]
  %v137 = vld [vmem:[%s1 + $0xf0] sm:$0xf]
  %v138 = vld [vmem:[%s1 + $0xf4] sm:$0xf]
  %v139 = vld [vmem:[%s1 + $0xf8] sm:$0xf]
  %v140 = vld [vmem:[%s1 + $0xfc] sm:$0xf]
  %v141 = vld [vmem:[%s1 + $0x100] sm:$0xf]
  %v142 = vld [vmem:[%s1 + $0x104] sm:$0xf]
  %v143 = vld [vmem:[%s1 + $0x108] sm:$0xf]
  %v144 = vld [vmem:[%s1 + $0x10c] sm:$0xf]
  %v145 = vld [vmem:[%s1 + $0x110] sm:$0xf]
  %v146 = vld [vmem:[%s1 + $0x114] sm:$0xf]
  %v147 = vld [vmem:[%s1 + $0x118] sm:$0xf]
  %v148 = vld [vmem:[%s1 + $0x11c] sm:$0xf]
  %v149 = vld [vmem:[%s1 + $0x120] sm:$0xf]
  %v150 = vld [vmem:[%s1 + $0x124] sm:$0xf]
  %v151 = vld [vmem:[%s1 + $0x128] sm:$0xf]
  %v152 = vld [vmem:[%s1 + $0x12c] sm:$0xf]
  %v153 = vld [vmem:[%s1 + $0x130] sm:$0xf]
  %v154 = vld [vmem:[%s1 + $0x134] sm:$0xf]
  %v155 = vld [vmem:[%s1 + $0x138] sm:$0xf]
  %v156 = vld [vmem:[%s1 + $0x13c] sm:$0xf]
  %v157 = vld [vmem:[%s1 + $0x140] sm:$0xf]
  %v158 = vld [vmem:[%s1 + $0x144] sm:$0xf]
  %v159 = vld [vmem:[%s1 + $0x148] sm:$0xf]
  %v160 = vld [vmem:[%s1 + $0x14c] sm:$0xf]
  %v161 = vld [vmem:[%s1 + $0x150] sm:$0xf]
  %v162 = vld [vmem:[%s1 + $0x154] sm:$0xf]
  %v163 = vld [vmem:[%s1 + $0x158] sm:$0xf]
  %v164 = vld [vmem:[%s1 + $0x15c] sm:$0xf]
  %v165 = vld [vmem:[%s1 + $0x160] sm:$0xf]
  %v166 = vld [vmem:[%s1 + $0x164] sm:$0xf]
  %v167 = vld [vmem:[%s1 + $0x168] sm:$0xf]
  %v168 = vld [vmem:[%s1 + $0x16c] sm:$0xf]
  %v169 = vld [vmem:[%s1 + $0x170] sm:$0xf]
  %v170 = vld [vmem:[%s1 + $0x174] sm:$0xf]
  %v171 = vld [vmem:[%s1 + $0x178] sm:$0xf]
  %v172 = vld [vmem:[%s1 + $0x17c] sm:$0xf]
  %v173 = vld [vmem:[%s1 + $0x180] sm:$0xf]
  %v174 = vld [vmem:[%s1 + $0x184] sm:$0xf]
  %v175 = vld [vmem:[%s1 + $0x188] sm:$0xf]
  %v176 = vld [vmem:[%s1 + $0x18c] sm:$0xf]
  %v177 = vld [vmem:[%s1 + $0x190] sm:$0xf]
  %v178 = vld [vmem:[%s1 + $0x194] sm:$0xf]
  %v179 = vld [vmem:[%s1 + $0x198] sm:$0xf]
  %v180 = vld [vmem:[%s1 + $0x19c] sm:$0xf]
  %v181 = vld [vmem:[%s1 + $0x1a0] sm:$0xf]
  %v182 = vld [vmem:[%s1 + $0x1a4] sm:$0xf]
  %v183 = vld [vmem:[%s1 + $0x1a8] sm:$0xf]
  %v184 = vld [vmem:[%s1 + $0x1ac] sm:$0xf]
  %v185 = vld [vmem:[%s1 + $0x1b0] sm:$0xf]
  %v186 = vld [vmem:[%s1 + $0x1b4] sm:$0xf]
  %v187 = vld [vmem:[%s1 + $0x1b8] sm:$0xf]
  %v188 = vld [vmem:[%s1 + $0x1bc] sm:$0xf]
  %v189 = vld [vmem:[%s1 + $0x1c0] sm:$0xf]
  %v190 = vld [vmem:[%s1 + $0x1c4] sm:$0xf]
  %v191 = vld [vmem:[%s1 + $0x1c8] sm:$0xf]
  %v192 = vld [vmem:[%s1 + $0x1cc] sm:$0xf]
  %v193 = vld [vmem:[%s1 + $0x1d0] sm:$0xf]
  %v194 = vld [vmem:[%s1 + $0x1d4] sm:$0xf]
  %v195 = vld [vmem:[%s1 + $0x1d8] sm:$0xf]
  %v196 = vld [vmem:[%s1 + $0x1dc] sm:$0xf]
  %v197 = vld [vmem:[%s1 + $0x1e0] sm:$0xf]
  %v198 = vld [vmem:[%s1 + $0x1e4] sm:$0xf]
  %v199 = vld [vmem:[%s1 + $0x1e8] sm:$0xf]
  %v200 = vld [vmem:[%s1 + $0x1ec] sm:$0xf]
  %v201 = vld [vmem:[%s1 + $0x1f0] sm:$0xf]
  %v202 = vld [vmem:[%s1 + $0x1f4] sm:$0xf]
  %v203 = vld [vmem:[%s1 + $0x1f8] sm:$0xf]
  %v204 = vld [vmem:[%s1 + $0x1fc] sm:$0xf]
  %v205 = vld [vmem:[%s2] sm:$0x1]
  %v207 = vlaneseq
  %v208 = vshrl.u32 %v207, 7
  %v209 = vsub.s32 0, %v208
  %v210 = vrot.slane %v205, %v209
  %v340 = vunpack.c.l.b16 %v77
  %v341 = vunpack.c.l.b16 %v78
  %v342 = vunpack.c.l.b16 %v79
  %v343 = vunpack.c.l.b16 %v80
  %v344 = vunpack.c.l.b16 %v81
  %v345 = vunpack.c.l.b16 %v82
  %v346 = vunpack.c.l.b16 %v83
  %v347 = vunpack.c.l.b16 %v84
  %v348 = vunpack.c.l.b16 %v85
  %v349 = vunpack.c.l.b16 %v86
  %v350 = vunpack.c.l.b16 %v87
  %v351 = vunpack.c.l.b16 %v88
  %v352 = vunpack.c.l.b16 %v89
  %v353 = vunpack.c.l.b16 %v90
  %v354 = vunpack.c.l.b16 %v91
  %v355 = vunpack.c.l.b16 %v92
  %v356 = vunpack.c.l.b16 %v93
  %v357 = vunpack.c.l.b16 %v94
  %v358 = vunpack.c.l.b16 %v95
  %v359 = vunpack.c.l.b16 %v96
  %v360 = vunpack.c.l.b16 %v97
  %v361 = vunpack.c.l.b16 %v98
  %v362 = vunpack.c.l.b16 %v99
  %v363 = vunpack.c.l.b16 %v100
  %v364 = vunpack.c.l.b16 %v101
  %v365 = vunpack.c.l.b16 %v102
  %v366 = vunpack.c.l.b16 %v103
  %v367 = vunpack.c.l.b16 %v104
  %v368 = vunpack.c.l.b16 %v105
  %v369 = vunpack.c.l.b16 %v106
  %v370 = vunpack.c.l.b16 %v107
  %v371 = vunpack.c.l.b16 %v108
  %v372 = vunpack.c.l.b16 %v109
  %v373 = vunpack.c.l.b16 %v110
  %v374 = vunpack.c.l.b16 %v111
  %v375 = vunpack.c.l.b16 %v112
  %v376 = vunpack.c.l.b16 %v113
  %v377 = vunpack.c.l.b16 %v114
  %v378 = vunpack.c.l.b16 %v115
  %v379 = vunpack.c.l.b16 %v116
  %v380 = vunpack.c.l.b16 %v117
  %v381 = vunpack.c.l.b16 %v118
  %v382 = vunpack.c.l.b16 %v119
  %v383 = vunpack.c.l.b16 %v120
  %v384 = vunpack.c.l.b16 %v121
  %v385 = vunpack.c.l.b16 %v122
  %v386 = vunpack.c.l.b16 %v123
  %v387 = vunpack.c.l.b16 %v124
  %v388 = vunpack.c.l.b16 %v125
  %v389 = vunpack.c.l.b16 %v126
  %v390 = vunpack.c.l.b16 %v127
  %v391 = vunpack.c.l.b16 %v128
  %v392 = vunpack.c.l.b16 %v129
  %v393 = vunpack.c.l.b16 %v130
  %v394 = vunpack.c.l.b16 %v131
  %v395 = vunpack.c.l.b16 %v132
  %v396 = vunpack.c.l.b16 %v133
  %v397 = vunpack.c.l.b16 %v134
  %v398 = vunpack.c.l.b16 %v135
  %v399 = vunpack.c.l.b16 %v136
  %v400 = vunpack.c.l.b16 %v137
  %v401 = vunpack.c.l.b16 %v138
  %v402 = vunpack.c.l.b16 %v139
  %v403 = vunpack.c.l.b16 %v140
  %v404 = vunpack.c.l.b16 %v141
  %v405 = vunpack.c.l.b16 %v142
  %v406 = vunpack.c.l.b16 %v143
  %v407 = vunpack.c.l.b16 %v144
  %v408 = vunpack.c.l.b16 %v145
  %v409 = vunpack.c.l.b16 %v146
  %v410 = vunpack.c.l.b16 %v147
  %v411 = vunpack.c.l.b16 %v148
  %v412 = vunpack.c.l.b16 %v149
  %v413 = vunpack.c.l.b16 %v150
  %v414 = vunpack.c.l.b16 %v151
  %v415 = vunpack.c.l.b16 %v152
  %v416 = vunpack.c.l.b16 %v153
  %v417 = vunpack.c.l.b16 %v154
  %v418 = vunpack.c.l.b16 %v155
  %v419 = vunpack.c.l.b16 %v156
  %v420 = vunpack.c.l.b16 %v157
  %v421 = vunpack.c.l.b16 %v158
  %v422 = vunpack.c.l.b16 %v159
  %v423 = vunpack.c.l.b16 %v160
  %v424 = vunpack.c.l.b16 %v161
  %v425 = vunpack.c.l.b16 %v162
  %v426 = vunpack.c.l.b16 %v163
  %v427 = vunpack.c.l.b16 %v164
  %v428 = vunpack.c.l.b16 %v165
  %v429 = vunpack.c.l.b16 %v166
  %v430 = vunpack.c.l.b16 %v167
  %v431 = vunpack.c.l.b16 %v168
  %v432 = vunpack.c.l.b16 %v169
  %v433 = vunpack.c.l.b16 %v170
  %v434 = vunpack.c.l.b16 %v171
  %v435 = vunpack.c.l.b16 %v172
  %v436 = vunpack.c.l.b16 %v173
  %v437 = vunpack.c.l.b16 %v174
  %v438 = vunpack.c.l.b16 %v175
  %v439 = vunpack.c.l.b16 %v176
  %v440 = vunpack.c.l.b16 %v177
  %v441 = vunpack.c.l.b16 %v178
  %v442 = vunpack.c.l.b16 %v179
  %v443 = vunpack.c.l.b16 %v180
  %v444 = vunpack.c.l.b16 %v181
  %v445 = vunpack.c.l.b16 %v182
  %v446 = vunpack.c.l.b16 %v183
  %v447 = vunpack.c.l.b16 %v184
  %v448 = vunpack.c.l.b16 %v185
  %v449 = vunpack.c.l.b16 %v186
  %v450 = vunpack.c.l.b16 %v187
  %v451 = vunpack.c.l.b16 %v188
  %v452 = vunpack.c.l.b16 %v189
  %v453 = vunpack.c.l.b16 %v190
  %v454 = vunpack.c.l.b16 %v191
  %v455 = vunpack.c.l.b16 %v192
  %v456 = vunpack.c.l.b16 %v193
  %v457 = vunpack.c.l.b16 %v194
  %v458 = vunpack.c.l.b16 %v195
  %v459 = vunpack.c.l.b16 %v196
  %v460 = vunpack.c.l.b16 %v197
  %v461 = vunpack.c.l.b16 %v198
  %v462 = vunpack.c.l.b16 %v199
  %v463 = vunpack.c.l.b16 %v200
  %v464 = vunpack.c.l.b16 %v201
  %v465 = vunpack.c.l.b16 %v202
  %v466 = vunpack.c.l.b16 %v203
  %v467 = vunpack.c.l.b16 %v204
  %v468 = vpack.c.b16 %v341, %v340
  %v469 = vpack.c.b16 %v343, %v342
  %v470 = vpack.c.b16 %v345, %v344
  %v471 = vpack.c.b16 %v347, %v346
  %v472 = vpack.c.b16 %v349, %v348
  %v473 = vpack.c.b16 %v351, %v350
  %v474 = vpack.c.b16 %v353, %v352
  %v475 = vpack.c.b16 %v355, %v354
  %v476 = vpack.c.b16 %v357, %v356
  %v477 = vpack.c.b16 %v359, %v358
  %v478 = vpack.c.b16 %v361, %v360
  %v479 = vpack.c.b16 %v363, %v362
  %v480 = vpack.c.b16 %v365, %v364
  %v481 = vpack.c.b16 %v367, %v366
  %v482 = vpack.c.b16 %v369, %v368
  %v483 = vpack.c.b16 %v371, %v370
  %v484 = vpack.c.b16 %v373, %v372
  %v485 = vpack.c.b16 %v375, %v374
  %v486 = vpack.c.b16 %v377, %v376
  %v487 = vpack.c.b16 %v379, %v378
  %v488 = vpack.c.b16 %v381, %v380
  %v489 = vpack.c.b16 %v383, %v382
  %v490 = vpack.c.b16 %v385, %v384
  %v491 = vpack.c.b16 %v387, %v386
  %v492 = vpack.c.b16 %v389, %v388
  %v493 = vpack.c.b16 %v391, %v390
  %v494 = vpack.c.b16 %v393, %v392
  %v495 = vpack.c.b16 %v395, %v394
  %v496 = vpack.c.b16 %v397, %v396
  %v497 = vpack.c.b16 %v399, %v398
  %v498 = vpack.c.b16 %v401, %v400
  %v499 = vpack.c.b16 %v403, %v402
  %v500 = vpack.c.b16 %v405, %v404
  %v501 = vpack.c.b16 %v407, %v406
  %v502 = vpack.c.b16 %v409, %v408
  %v503 = vpack.c.b16 %v411, %v410
  %v504 = vpack.c.b16 %v413, %v412
  %v505 = vpack.c.b16 %v415, %v414
  %v506 = vpack.c.b16 %v417, %v416
  %v507 = vpack.c.b16 %v419, %v418
  %v508 = vpack.c.b16 %v421, %v420
  %v509 = vpack.c.b16 %v423, %v422
  %v510 = vpack.c.b16 %v425, %v424
  %v511 = vpack.c.b16 %v427, %v426
  %v512 = vpack.c.b16 %v429, %v428
  %v513 = vpack.c.b16 %v431, %v430
  %v514 = vpack.c.b16 %v433, %v432
  %v515 = vpack.c.b16 %v435, %v434
  %v516 = vpack.c.b16 %v437, %v436
  %v517 = vpack.c.b16 %v439, %v438
  %v518 = vpack.c.b16 %v441, %v440
  %v519 = vpack.c.b16 %v443, %v442
  %v520 = vpack.c.b16 %v445, %v444
  %v521 = vpack.c.b16 %v447, %v446
  %v522 = vpack.c.b16 %v449, %v448
  %v523 = vpack.c.b16 %v451, %v450
  %v524 = vpack.c.b16 %v453, %v452
  %v525 = vpack.c.b16 %v455, %v454
  %v526 = vpack.c.b16 %v457, %v456
  %v527 = vpack.c.b16 %v459, %v458
  %v528 = vpack.c.b16 %v461, %v460
  %v529 = vpack.c.b16 %v463, %v462
  %v530 = vpack.c.b16 %v465, %v464
  %v531 = vpack.c.b16 %v467, %v466
  %596 = vmatprep.subr.bf16.mxu0 0
  %597 = vmatpush1.bf16.msra.mxu0 %v468
  %598 = vmatprep.subr.bf16.mxu0 0
  %599 = vmatpush1.bf16.msra.mxu0 %v469
  %600 = vmatprep.subr.bf16.mxu0 0
  %601 = vmatpush1.bf16.msra.mxu0 %v470
  %602 = vmatprep.subr.bf16.mxu0 0
  %603 = vmatpush1.bf16.msra.mxu0 %v471
  %604 = vmatprep.subr.bf16.mxu0 0
  %605 = vmatpush1.bf16.msra.mxu0 %v472
  %606 = vmatprep.subr.bf16.mxu0 0
  %607 = vmatpush1.bf16.msra.mxu0 %v473
  %608 = vmatprep.subr.bf16.mxu0 0
  %609 = vmatpush1.bf16.msra.mxu0 %v474
  %610 = vmatprep.subr.bf16.mxu0 0
  %611 = vmatpush1.bf16.msra.mxu0 %v475
  %612 = vmatprep.subr.bf16.mxu0 0
  %613 = vmatpush1.bf16.msra.mxu0 %v476
  %614 = vmatprep.subr.bf16.mxu0 0
  %615 = vmatpush1.bf16.msra.mxu0 %v477
  %616 = vmatprep.subr.bf16.mxu0 0
  %617 = vmatpush1.bf16.msra.mxu0 %v478
  %618 = vmatprep.subr.bf16.mxu0 0
  %619 = vmatpush1.bf16.msra.mxu0 %v479
  %620 = vmatprep.subr.bf16.mxu0 0
  %621 = vmatpush1.bf16.msra.mxu0 %v480
  %622 = vmatprep.subr.bf16.mxu0 0
  %623 = vmatpush1.bf16.msra.mxu0 %v481
  %624 = vmatprep.subr.bf16.mxu0 0
  %625 = vmatpush1.bf16.msra.mxu0 %v482
  %626 = vmatprep.subr.bf16.mxu0 0
  %627 = vmatpush1.bf16.msra.mxu0 %v483
  %628 = vmatprep.mubr.bf16.mxu0 %v70
  %629 = vmatmul.mubr.bf16.gmra.mrb[0].mxu0 %v69
  %v630 = vpop.f32.mrb[0].mxu0
  %v631 = vadd.f32 %v210, %v630
  %v632 = vpop.f32.mrb[0].mxu0
  %v633 = vpop.f32.mrb[0].mxu0
  %v634 = vpop.f32.mrb[0].mxu0
  %635 = vdwg.mxu0
  %636 = vmatprep.subr.bf16.mxu0 0
  %637 = vmatpush1.bf16.msra.mxu0 %v484
  %638 = vmatprep.subr.bf16.mxu0 0
  %639 = vmatpush1.bf16.msra.mxu0 %v485
  %640 = vmatprep.subr.bf16.mxu0 0
  %641 = vmatpush1.bf16.msra.mxu0 %v486
  %642 = vmatprep.subr.bf16.mxu0 0
  %643 = vmatpush1.bf16.msra.mxu0 %v487
  %644 = vmatprep.subr.bf16.mxu0 0
  %645 = vmatpush1.bf16.msra.mxu0 %v488
  %646 = vmatprep.subr.bf16.mxu0 0
  %647 = vmatpush1.bf16.msra.mxu0 %v489
  %648 = vmatprep.subr.bf16.mxu0 0
  %649 = vmatpush1.bf16.msra.mxu0 %v490
  %650 = vmatprep.subr.bf16.mxu0 0
  %651 = vmatpush1.bf16.msra.mxu0 %v491
  %652 = vmatprep.subr.bf16.mxu0 0
  %653 = vmatpush1.bf16.msra.mxu0 %v492
  %654 = vmatprep.subr.bf16.mxu0 0
  %655 = vmatpush1.bf16.msra.mxu0 %v493
  %656 = vmatprep.subr.bf16.mxu0 0
  %657 = vmatpush1.bf16.msra.mxu0 %v494
  %658 = vmatprep.subr.bf16.mxu0 0
  %659 = vmatpush1.bf16.msra.mxu0 %v495
  %660 = vmatprep.subr.bf16.mxu0 0
  %661 = vmatpush1.bf16.msra.mxu0 %v496
  %662 = vmatprep.subr.bf16.mxu0 0
  %663 = vmatpush1.bf16.msra.mxu0 %v497
  %664 = vmatprep.subr.bf16.mxu0 0
  %665 = vmatpush1.bf16.msra.mxu0 %v498
  %666 = vmatprep.subr.bf16.mxu0 0
  %667 = vmatpush1.bf16.msra.mxu0 %v499
  %668 = vmatprep.mubr.bf16.mxu0 %v72
  %669 = vmatmul.mubr.bf16.gmra.mrb[0].mxu0 %v71
  %v670 = vpop.f32.mrb[0].mxu0
  %v671 = vadd.f32 %v631, %v670
  %v672 = vpop.f32.mrb[0].mxu0
  %v673 = vpop.f32.mrb[0].mxu0
  %v674 = vpop.f32.mrb[0].mxu0
  %675 = vdwg.mxu0
  %676 = vmatprep.subr.bf16.mxu0 0
  %677 = vmatpush1.bf16.msra.mxu0 %v500
  %678 = vmatprep.subr.bf16.mxu0 0
  %679 = vmatpush1.bf16.msra.mxu0 %v501
  %680 = vmatprep.subr.bf16.mxu0 0
  %681 = vmatpush1.bf16.msra.mxu0 %v502
  %682 = vmatprep.subr.bf16.mxu0 0
  %683 = vmatpush1.bf16.msra.mxu0 %v503
  %684 = vmatprep.subr.bf16.mxu0 0
  %685 = vmatpush1.bf16.msra.mxu0 %v504
  %686 = vmatprep.subr.bf16.mxu0 0
  %687 = vmatpush1.bf16.msra.mxu0 %v505
  %688 = vmatprep.subr.bf16.mxu0 0
  %689 = vmatpush1.bf16.msra.mxu0 %v506
  %690 = vmatprep.subr.bf16.mxu0 0
  %691 = vmatpush1.bf16.msra.mxu0 %v507
  %692 = vmatprep.subr.bf16.mxu0 0
  %693 = vmatpush1.bf16.msra.mxu0 %v508
  %694 = vmatprep.subr.bf16.mxu0 0
  %695 = vmatpush1.bf16.msra.mxu0 %v509
  %696 = vmatprep.subr.bf16.mxu0 0
  %697 = vmatpush1.bf16.msra.mxu0 %v510
  %698 = vmatprep.subr.bf16.mxu0 0
  %699 = vmatpush1.bf16.msra.mxu0 %v511
  %700 = vmatprep.subr.bf16.mxu0 0
  %701 = vmatpush1.bf16.msra.mxu0 %v512
  %702 = vmatprep.subr.bf16.mxu0 0
  %703 = vmatpush1.bf16.msra.mxu0 %v513
  %704 = vmatprep.subr.bf16.mxu0 0
  %705 = vmatpush1.bf16.msra.mxu0 %v514
  %706 = vmatprep.subr.bf16.mxu0 0
  %707 = vmatpush1.bf16.msra.mxu0 %v515
  %708 = vmatprep.mubr.bf16.mxu0 %v74
  %709 = vmatmul.mubr.bf16.gmra.mrb[0].mxu0 %v73
  %v710 = vpop.f32.mrb[0].mxu0
  %v711 = vadd.f32 %v671, %v710
  %v712 = vpop.f32.mrb[0].mxu0
  %v713 = vpop.f32.mrb[0].mxu0
  %v714 = vpop.f32.mrb[0].mxu0
  %715 = vdwg.mxu0
  %716 = vmatprep.subr.bf16.mxu0 0
  %717 = vmatpush1.bf16.msra.mxu0 %v516
  %718 = vmatprep.subr.bf16.mxu0 0
  %719 = vmatpush1.bf16.msra.mxu0 %v517
  %720 = vmatprep.subr.bf16.mxu0 0
  %721 = vmatpush1.bf16.msra.mxu0 %v518
  %722 = vmatprep.subr.bf16.mxu0 0
  %723 = vmatpush1.bf16.msra.mxu0 %v519
  %724 = vmatprep.subr.bf16.mxu0 0
  %725 = vmatpush1.bf16.msra.mxu0 %v520
  %726 = vmatprep.subr.bf16.mxu0 0
  %727 = vmatpush1.bf16.msra.mxu0 %v521
  %728 = vmatprep.subr.bf16.mxu0 0
  %729 = vmatpush1.bf16.msra.mxu0 %v522
  %730 = vmatprep.subr.bf16.mxu0 0
  %731 = vmatpush1.bf16.msra.mxu0 %v523
  %732 = vmatprep.subr.bf16.mxu0 0
  %733 = vmatpush1.bf16.msra.mxu0 %v524
  %734 = vmatprep.subr.bf16.mxu0 0
  %735 = vmatpush1.bf16.msra.mxu0 %v525
  %736 = vmatprep.subr.bf16.mxu0 0
  %737 = vmatpush1.bf16.msra.mxu0 %v526
  %738 = vmatprep.subr.bf16.mxu0 0
  %739 = vmatpush1.bf16.msra.mxu0 %v527
  %740 = vmatprep.subr.bf16.mxu0 0
  %741 = vmatpush1.bf16.msra.mxu0 %v528
  %742 = vmatprep.subr.bf16.mxu0 0
  %743 = vmatpush1.bf16.msra.mxu0 %v529
  %744 = vmatprep.subr.bf16.mxu0 0
  %745 = vmatpush1.bf16.msra.mxu0 %v530
  %746 = vmatprep.subr.bf16.mxu0 0
  %747 = vmatpush1.bf16.msra.mxu0 %v531
  %748 = vmatprep.mubr.bf16.mxu0 %v76
  %749 = vmatmul.mubr.bf16.gmra.mrb[0].mxu0 %v75
  %v750 = vpop.f32.mrb[0].mxu0
  %v751 = vadd.f32 %v711, %v750
  %v752 = vpop.f32.mrb[0].mxu0
  %v753 = vpop.f32.mrb[0].mxu0
  %v754 = vpop.f32.mrb[0].mxu0
  %755 = vdwg.mxu0
  %v756 = vmax.f32 %v751, 0.0
  %v757 = vpack.c.bf16 %v756, %v756
  %v758 = vld [vmem:[%s3] sm:$0xff]
  %v759 = vld [vmem:[%s3 + $0x8] sm:$0xff]
  %v760 = vld [vmem:[%s3 + $0x10] sm:$0xff]
  %v761 = vld [vmem:[%s3 + $0x18] sm:$0xff]
  %v762 = vld [vmem:[%s3 + $0x20] sm:$0xff]
  %v763 = vld [vmem:[%s3 + $0x28] sm:$0xff]
  %v764 = vld [vmem:[%s3 + $0x30] sm:$0xff]
  %v765 = vld [vmem:[%s3 + $0x38] sm:$0xff]
  %v766 = vld [vmem:[%s3 + $0x40] sm:$0xff]
  %v767 = vld [vmem:[%s3 + $0x48] sm:$0xff]
  %v768 = vld [vmem:[%s3 + $0x50] sm:$0xff]
  %v769 = vld [vmem:[%s3 + $0x58] sm:$0xff]
  %v770 = vld [vmem:[%s3 + $0x60] sm:$0xff]
  %v771 = vld [vmem:[%s3 + $0x68] sm:$0xff]
  %v772 = vld [vmem:[%s3 + $0x70] sm:$0xff]
  %v773 = vld [vmem:[%s3 + $0x78] sm:$0xff]
  %v774 = vld [vmem:[%s4] sm:$0xff]
  %v776 = vlaneseq
  %v777 = vshrl.u32 %v776, 7
  %v778 = vsub.s32 0, %v777
  %v779 = vrot.slane %v774, %v778
  %v780 = vlaneseq
  %v781 = vshrl.u32 %v780, 7
  %v782 = vsub.s32 1, %v781
  %v783 = vrot.slane %v774, %v782
  %v784 = vlaneseq
  %v785 = vshrl.u32 %v784, 7
  %v786 = vsub.s32 2, %v785
  %v787 = vrot.slane %v774, %v786
  %v788 = vlaneseq
  %v789 = vshrl.u32 %v788, 7
  %v790 = vsub.s32 3, %v789
  %v791 = vrot.slane %v774, %v790
  %v792 = vlaneseq
  %v793 = vshrl.u32 %v792, 7
  %v794 = vsub.s32 4, %v793
  %v795 = vrot.slane %v774, %v794
  %v796 = vlaneseq
  %v797 = vshrl.u32 %v796, 7
  %v798 = vsub.s32 5, %v797
  %v799 = vrot.slane %v774, %v798
  %v800 = vlaneseq
  %v801 = vshrl.u32 %v800, 7
  %v802 = vsub.s32 6, %v801
  %v803 = vrot.slane %v774, %v802
  %v804 = vlaneseq
  %v805 = vshrl.u32 %v804, 7
  %v806 = vsub.s32 7, %v805
  %v807 = vrot.slane %v774, %v806
  %v832 = vunpack.c.l.b16 %v758
  %v833 = vunpack.c.h.b16 %v758
  %v834 = vunpack.c.l.b16 %v759
  %v835 = vunpack.c.h.b16 %v759
  %v836 = vunpack.c.l.b16 %v760
  %v837 = vunpack.c.h.b16 %v760
  %v838 = vunpack.c.l.b16 %v761
  %v839 = vunpack.c.h.b16 %v761
  %v840 = vunpack.c.l.b16 %v762
  %v841 = vunpack.c.h.b16 %v762
  %v842 = vunpack.c.l.b16 %v763
  %v843 = vunpack.c.h.b16 %v763
  %v844 = vunpack.c.l.b16 %v764
  %v845 = vunpack.c.h.b16 %v764
  %v846 = vunpack.c.l.b16 %v765
  %v847 = vunpack.c.h.b16 %v765
  %v848 = vunpack.c.l.b16 %v766
  %v849 = vunpack.c.h.b16 %v766
  %v850 = vunpack.c.l.b16 %v767
  %v851 = vunpack.c.h.b16 %v767
  %v852 = vunpack.c.l.b16 %v768
  %v853 = vunpack.c.h.b16 %v768
  %v854 = vunpack.c.l.b16 %v769
  %v855 = vunpack.c.h.b16 %v769
  %v856 = vunpack.c.l.b16 %v770
  %v857 = vunpack.c.h.b16 %v770
  %v858 = vunpack.c.l.b16 %v771
  %v859 = vunpack.c.h.b16 %v771
  %v860 = vunpack.c.l.b16 %v772
  %v861 = vunpack.c.h.b16 %v772
  %v862 = vunpack.c.l.b16 %v773
  %v863 = vunpack.c.h.b16 %v773
  %v864 = vpack.c.b16 %v840, %v832
  %v865 = vpack.c.b16 %v841, %v833
  %v866 = vpack.c.b16 %v842, %v834
  %v867 = vpack.c.b16 %v843, %v835
  %v868 = vpack.c.b16 %v844, %v836
  %v869 = vpack.c.b16 %v845, %v837
  %v870 = vpack.c.b16 %v846, %v838
  %v871 = vpack.c.b16 %v847, %v839
  %v872 = vpack.c.b16 %v856, %v848
  %v873 = vpack.c.b16 %v857, %v849
  %v874 = vpack.c.b16 %v858, %v850
  %v875 = vpack.c.b16 %v859, %v851
  %v876 = vpack.c.b16 %v860, %v852
  %v877 = vpack.c.b16 %v861, %v853
  %v878 = vpack.c.b16 %v862, %v854
  %v879 = vpack.c.b16 %v863, %v855
  %vm896 = vcmask 261120
  %v898 = vsel %vm896, %v757, 0
  %900 = vmatprep.subr.bf16.mxu0 %v865
  %901 = vmatpush1.bf16.msra.mxu0 %v864
  %902 = vmatprep.subr.bf16.mxu0 %v873
  %903 = vmatpush1.bf16.msra.mxu0 %v872
  %904 = vmatprep.subr.bf16.mxu0 0
  %905 = vmatpush1.bf16.msra.mxu0 0
  %906 = vmatprep.subr.bf16.mxu0 0
  %907 = vmatpush1.bf16.msra.mxu0 0
  %908 = vmatprep.subr.bf16.mxu0 0
  %909 = vmatpush1.bf16.msra.mxu0 0
  %910 = vmatprep.subr.bf16.mxu0 0
  %911 = vmatpush1.bf16.msra.mxu0 0
  %912 = vmatprep.subr.bf16.mxu0 0
  %913 = vmatpush1.bf16.msra.mxu0 0
  %914 = vmatprep.subr.bf16.mxu0 0
  %915 = vmatpush1.bf16.msra.mxu0 0
  %916 = vmatprep.subr.bf16.mxu0 0
  %917 = vmatpush1.bf16.msra.mxu0 0
  %918 = vmatprep.subr.bf16.mxu0 0
  %919 = vmatpush1.bf16.msra.mxu0 0
  %920 = vmatprep.subr.bf16.mxu0 0
  %921 = vmatpush1.bf16.msra.mxu0 0
  %922 = vmatprep.subr.bf16.mxu0 0
  %923 = vmatpush1.bf16.msra.mxu0 0
  %924 = vmatprep.subr.bf16.mxu0 0
  %925 = vmatpush1.bf16.msra.mxu0 0
  %926 = vmatprep.subr.bf16.mxu0 0
  %927 = vmatpush1.bf16.msra.mxu0 0
  %928 = vmatprep.subr.bf16.mxu0 0
  %929 = vmatpush1.bf16.msra.mxu0 0
  %930 = vmatprep.subr.bf16.mxu0 0
  %931 = vmatpush1.bf16.msra.mxu0 0
  %932 = vmatprep.mubr.bf16.mxu0 0
  %933 = vmatmul.mubr.bf16.gmra.mrb[0].mxu0 %v898
  %v934 = vpop.f32.mrb[0].mxu0
  %v935 = vadd.f32 %v779, %v934
  %v936 = vpop.f32.mrb[0].mxu0
  %v937 = vadd.f32 %v783, %v936
  %v938 = vpop.f32.mrb[0].mxu0
  %v939 = vpop.f32.mrb[0].mxu0
  %940 = vdwg.mxu0
  %941 = vmatprep.subr.bf16.mxu0 %v867
  %942 = vmatpush1.bf16.msra.mxu0 %v866
  %943 = vmatprep.subr.bf16.mxu0 %v875
  %944 = vmatpush1.bf16.msra.mxu0 %v874
  %945 = vmatprep.subr.bf16.mxu0 0
  %946 = vmatpush1.bf16.msra.mxu0 0
  %947 = vmatprep.subr.bf16.mxu0 0
  %948 = vmatpush1.bf16.msra.mxu0 0
  %949 = vmatprep.subr.bf16.mxu0 0
  %950 = vmatpush1.bf16.msra.mxu0 0
  %951 = vmatprep.subr.bf16.mxu0 0
  %952 = vmatpush1.bf16.msra.mxu0 0
  %953 = vmatprep.subr.bf16.mxu0 0
  %954 = vmatpush1.bf16.msra.mxu0 0
  %955 = vmatprep.subr.bf16.mxu0 0
  %956 = vmatpush1.bf16.msra.mxu0 0
  %957 = vmatprep.subr.bf16.mxu0 0
  %958 = vmatpush1.bf16.msra.mxu0 0
  %959 = vmatprep.subr.bf16.mxu0 0
  %960 = vmatpush1.bf16.msra.mxu0 0
  %961 = vmatprep.subr.bf16.mxu0 0
  %962 = vmatpush1.bf16.msra.mxu0 0
  %963 = vmatprep.subr.bf16.mxu0 0
  %964 = vmatpush1.bf16.msra.mxu0 0
  %965 = vmatprep.subr.bf16.mxu0 0
  %966 = vmatpush1.bf16.msra.mxu0 0
  %967 = vmatprep.subr.bf16.mxu0 0
  %968 = vmatpush1.bf16.msra.mxu0 0
  %969 = vmatprep.subr.bf16.mxu0 0
  %970 = vmatpush1.bf16.msra.mxu0 0
  %971 = vmatprep.subr.bf16.mxu0 0
  %972 = vmatpush1.bf16.msra.mxu0 0
  %973 = vmatprep.mubr.bf16.mxu0 0
  %974 = vmatmul.mubr.bf16.gmra.mrb[0].mxu0 %v898
  %v975 = vpop.f32.mrb[0].mxu0
  %v976 = vadd.f32 %v787, %v975
  %v977 = vpop.f32.mrb[0].mxu0
  %v978 = vadd.f32 %v791, %v977
  %v979 = vpop.f32.mrb[0].mxu0
  %v980 = vpop.f32.mrb[0].mxu0
  %981 = vdwg.mxu0
  %982 = vmatprep.subr.bf16.mxu0 %v869
  %983 = vmatpush1.bf16.msra.mxu0 %v868
  %984 = vmatprep.subr.bf16.mxu0 %v877
  %985 = vmatpush1.bf16.msra.mxu0 %v876
  %986 = vmatprep.subr.bf16.mxu0 0
  %987 = vmatpush1.bf16.msra.mxu0 0
  %988 = vmatprep.subr.bf16.mxu0 0
  %989 = vmatpush1.bf16.msra.mxu0 0
  %990 = vmatprep.subr.bf16.mxu0 0
  %991 = vmatpush1.bf16.msra.mxu0 0
  %992 = vmatprep.subr.bf16.mxu0 0
  %993 = vmatpush1.bf16.msra.mxu0 0
  %994 = vmatprep.subr.bf16.mxu0 0
  %995 = vmatpush1.bf16.msra.mxu0 0
  %996 = vmatprep.subr.bf16.mxu0 0
  %997 = vmatpush1.bf16.msra.mxu0 0
  %998 = vmatprep.subr.bf16.mxu0 0
  %999 = vmatpush1.bf16.msra.mxu0 0
  %1000 = vmatprep.subr.bf16.mxu0 0
  %1001 = vmatpush1.bf16.msra.mxu0 0
  %1002 = vmatprep.subr.bf16.mxu0 0
  %1003 = vmatpush1.bf16.msra.mxu0 0
  %1004 = vmatprep.subr.bf16.mxu0 0
  %1005 = vmatpush1.bf16.msra.mxu0 0
  %1006 = vmatprep.subr.bf16.mxu0 0
  %1007 = vmatpush1.bf16.msra.mxu0 0
  %1008 = vmatprep.subr.bf16.mxu0 0
  %1009 = vmatpush1.bf16.msra.mxu0 0
  %1010 = vmatprep.subr.bf16.mxu0 0
  %1011 = vmatpush1.bf16.msra.mxu0 0
  %1012 = vmatprep.subr.bf16.mxu0 0
  %1013 = vmatpush1.bf16.msra.mxu0 0
  %1014 = vmatprep.mubr.bf16.mxu0 0
  %1015 = vmatmul.mubr.bf16.gmra.mrb[0].mxu0 %v898
  %v1016 = vpop.f32.mrb[0].mxu0
  %v1017 = vadd.f32 %v795, %v1016
  %v1018 = vpop.f32.mrb[0].mxu0
  %v1019 = vadd.f32 %v799, %v1018
  %v1020 = vpop.f32.mrb[0].mxu0
  %v1021 = vpop.f32.mrb[0].mxu0
  %1022 = vdwg.mxu0
  %1023 = vmatprep.subr.bf16.mxu0 %v871
  %1024 = vmatpush1.bf16.msra.mxu0 %v870
  %1025 = vmatprep.subr.bf16.mxu0 %v879
  %1026 = vmatpush1.bf16.msra.mxu0 %v878
  %1027 = vmatprep.subr.bf16.mxu0 0
  %1028 = vmatpush1.bf16.msra.mxu0 0
  %1029 = vmatprep.subr.bf16.mxu0 0
  %1030 = vmatpush1.bf16.msra.mxu0 0
  %1031 = vmatprep.subr.bf16.mxu0 0
  %1032 = vmatpush1.bf16.msra.mxu0 0
  %1033 = vmatprep.subr.bf16.mxu0 0
  %1034 = vmatpush1.bf16.msra.mxu0 0
  %1035 = vmatprep.subr.bf16.mxu0 0
  %1036 = vmatpush1.bf16.msra.mxu0 0
  %1037 = vmatprep.subr.bf16.mxu0 0
  %1038 = vmatpush1.bf16.msra.mxu0 0
  %1039 = vmatprep.subr.bf16.mxu0 0
  %1040 = vmatpush1.bf16.msra.mxu0 0
  %1041 = vmatprep.subr.bf16.mxu0 0
  %1042 = vmatpush1.bf16.msra.mxu0 0
  %1043 = vmatprep.subr.bf16.mxu0 0
  %1044 = vmatpush1.bf16.msra.mxu0 0
  %1045 = vmatprep.subr.bf16.mxu0 0
  %1046 = vmatpush1.bf16.msra.mxu0 0
  %1047 = vmatprep.subr.bf16.mxu0 0
  %1048 = vmatpush1.bf16.msra.mxu0 0
  %1049 = vmatprep.subr.bf16.mxu0 0
  %1050 = vmatpush1.bf16.msra.mxu0 0
  %1051 = vmatprep.subr.bf16.mxu0 0
  %1052 = vmatpush1.bf16.msra.mxu0 0
  %1053 = vmatprep.subr.bf16.mxu0 0
  %1054 = vmatpush1.bf16.msra.mxu0 0
  %1055 = vmatprep.mubr.bf16.mxu0 0
  %1056 = vmatmul.mubr.bf16.gmra.mrb[0].mxu0 %v898
  %v1057 = vpop.f32.mrb[0].mxu0
  %v1058 = vadd.f32 %v803, %v1057
  %v1059 = vpop.f32.mrb[0].mxu0
  %v1060 = vadd.f32 %v807, %v1059
  %v1061 = vpop.f32.mrb[0].mxu0
  %v1062 = vpop.f32.mrb[0].mxu0
  %1063 = vdwg.mxu0
  %v1064 = vsub.f32 %v935, %v34
  %v1065 = vsub.f32 %v937, %v42
  %v1066 = vsub.f32 %v976, %v41
  %v1067 = vsub.f32 %v978, %v43
  %v1068 = vsub.f32 %v1017, %v51
  %v1069 = vsub.f32 %v1019, %v59
  %v1070 = vsub.f32 %v1058, %v58
  %v1071 = vsub.f32 %v1060, %v60
  %v1072 = vmul.f32 %v1064, %v1064
  %v1073 = vmul.f32 %v1065, %v1065
  %v1074 = vmul.f32 %v1066, %v1066
  %v1075 = vmul.f32 %v1067, %v1067
  %v1076 = vmul.f32 %v1068, %v1068
  %v1077 = vmul.f32 %v1069, %v1069
  %v1078 = vmul.f32 %v1070, %v1070
  %v1079 = vmul.f32 %v1071, %v1071
  %vm1080 = vcmask 1041408
  %v1081 = vsel %vm1080, %v1072, 0.0
  %v1082 = vsel %vm1080, %v1073, 0.0
  %v1083 = vadd.f32 %v1081, %v1082
  %v1084 = vsel %vm1080, %v1074, 0.0
  %v1085 = vadd.f32 %v1083, %v1084
  %v1086 = vsel %vm1080, %v1075, 0.0
  %v1087 = vadd.f32 %v1085, %v1086
  %v1088 = vsel %vm1080, %v1076, 0.0
  %v1089 = vadd.f32 %v1087, %v1088
  %v1090 = vsel %vm1080, %v1077, 0.0
  %v1091 = vadd.f32 %v1089, %v1090
  %v1092 = vsel %vm1080, %v1078, 0.0
  %v1093 = vadd.f32 %v1091, %v1092
  %v1094 = vsel %vm1080, %v1079, 0.0
  %v1095 = vadd.f32 %v1093, %v1094
  %1096 = vadd.xlane.f32.xlu0 %v1095
  %v1097 = vpop.xlane.xlu0 %1096
  %s1098 = smul.u32 0, 2
  %v1099 = vlaneseq
  %v1100 = vshrl.u32 %v1099, 7
  %v1101 = vstv %s1098
  %v1102 = vadd.s32 %v1101, %v1100
  %vm1103 = vcmp.lt.s32.totalorder %v1102, 2
  %v1104 = vsel %vm1103, %v1097, 0.0
  %vm1105 = vcmask 1024
  %1106 = vst.msk [vmem:[%s6] sm:$0x3] %vm1105, %v1104
  %v1107 = vpack.c.bf16 %v935, %v935
  %v1108 = vpack.c.bf16 %v937, %v937
  %v1109 = vpack.c.bf16 %v976, %v976
  %v1110 = vpack.c.bf16 %v978, %v978
  %v1111 = vpack.c.bf16 %v1017, %v1017
  %v1112 = vpack.c.bf16 %v1019, %v1019
  %v1113 = vpack.c.bf16 %v1058, %v1058
  %v1114 = vpack.c.bf16 %v1060, %v1060
  %v1123 = vcombine.low %v1107, %v1108
  %v1124 = vcombine.low %v1109, %v1110
  %v1125 = vcombine.low %v1111, %v1112
  %v1126 = vcombine.low %v1113, %v1114
  %v1128 = vunpack.c.l.s4 1966171168
  %v1129 = vunpack.c.0.s8 %v1128
  %v1130 = vlaneseq
  %v1131 = vshrl.u32 %v1130, 7
  %v1132 = vsub.s32 %v1129, %v1131
  %v1133 = vrot.slane %v1123, %v1132
  %v1135 = vunpack.c.l.s4 1966171168
  %v1136 = vunpack.c.0.s8 %v1135
  %v1137 = vlaneseq
  %v1138 = vshrl.u32 %v1137, 7
  %v1139 = vsub.s32 %v1136, %v1138
  %v1140 = vrot.slane %v1124, %v1139
  %v1142 = vunpack.c.l.s4 1966171168
  %v1143 = vunpack.c.0.s8 %v1142
  %v1144 = vlaneseq
  %v1145 = vshrl.u32 %v1144, 7
  %v1146 = vsub.s32 %v1143, %v1145
  %v1147 = vrot.slane %v1125, %v1146
  %v1149 = vunpack.c.l.s4 1966171168
  %v1150 = vunpack.c.0.s8 %v1149
  %v1151 = vlaneseq
  %v1152 = vshrl.u32 %v1151, 7
  %v1153 = vsub.s32 %v1150, %v1152
  %v1154 = vrot.slane %v1126, %v1153
  %v1155 = vcombine.low %v1133, %v1140
  %v1156 = vcombine.low %v1147, %v1154
  %v1158 = vunpack.c.l.s4 1966171168
  %v1159 = vunpack.c.0.s8 %v1158
  %v1160 = vlaneseq
  %v1161 = vshrl.u32 %v1160, 7
  %v1162 = vsub.s32 %v1159, %v1161
  %v1163 = vrot.slane %v1155, %v1162
  %v1165 = vunpack.c.l.s4 1966171168
  %v1166 = vunpack.c.0.s8 %v1165
  %v1167 = vlaneseq
  %v1168 = vshrl.u32 %v1167, 7
  %v1169 = vsub.s32 %v1166, %v1168
  %v1170 = vrot.slane %v1156, %v1169
  %v1171 = vcombine.low %v1163, %v1170
  %1173 = vst [vmem:[%s5] sm:$0xff] %v1171
  // Predicated region
  $region22: #{predictor_forward.1} parent=0 // pred_check
    _
  $region23: #{predictor_forward.1} parent=0 // pred_check_branch
    %1175 = sbr.rel (0) target = $region25
  $region24: #{predictor_forward.1} parent=0 // pred_region
    _
  $region25: #{predictor_forward.1} parent=0 // pred_fallthru
    _
  // Predicated region
  $region26: #{predictor_forward.1} parent=0 // pred_check
    _
  $region27: #{predictor_forward.1} parent=0 // pred_check_branch
    %1177 = sbr.rel (0) target = $region29
  $region28: #{predictor_forward.1} parent=0 // pred_region
    _
  $region29: #{predictor_forward.1} parent=0 // pred_fallthru
    _
  // Predicated region
  $region30: #{predictor_forward.1} parent=0 // pred_check
    _
  $region31: #{predictor_forward.1} parent=0 // pred_check_branch
    %1179 = sbr.rel (0) target = $region33
  $region32: #{predictor_forward.1} parent=0 // pred_region
    _
  $region33: #{predictor_forward.1} parent=0 // pred_fallthru
    _
  // Predicated region
  $region34: #{predictor_forward.1} parent=0 // pred_check
    _
  $region35: #{predictor_forward.1} parent=0 // pred_check_branch
    %1181 = sbr.rel (0) target = $region37
  $region36: #{predictor_forward.1} parent=0 // pred_region
    _
  $region37: #{predictor_forward.1} parent=0 // pred_fallthru
    _

</llo_original>
